<compile_context>
chip_gen: v6e
topology: v6e:2x2x1
jax: 0.10.0
libtpu: 0.0.40
codegen_flags: <defaults>
</compile_context>

<pallas_src>
import jax
import jax.numpy as jnp
from jax.experimental import pallas as pl
from jax.experimental.pallas import tpu as pltpu


def _round_up(x, m):
    return ((x + m - 1) // m) * m


def _slnet_head_kernel(ge_ref, w1_ref, b1_ref, w2_ref, b2_ref, out_ref):
    """One batch tile: relu(ge @ W1 + b1) . w2 + b2, written lane-dense."""
    # Cast to bf16 *inside* the kernel: the HBM stream keeps the producer dtype,
    # no separate wrapper-side XLA pass over the dominant array.
    ge = ge_ref[...].astype(jnp.bfloat16)
    # linear_1: MXU matmul (bf16 inputs, f32 accumulate), bias + ReLU on the VPU.
    h = jnp.dot(ge, w1_ref[...], preferred_element_type=jnp.float32)      # [TB, H]
    h = jnp.maximum(h + b1_ref[...], 0.0)
    # linear_out has a single output feature: a [TB,H]@[H,1] matmul would use one
    # MXU output column and pay a full result drain, so do it as a VPU multiply +
    # XLU lane reduction (those slots are otherwise idle).  b2 is an SMEM scalar.
    s = jnp.sum(h * w2_ref[...], axis=-1) + b2_ref[0]                     # [TB]
    # Lane-dense store: TB results along lanes -> unmasked full-width stores and
    # a contiguous output DMA (matters most on v5e's single vector-store slot).
    out_ref[...] = s[None, None, :]                                       # [1,1,TB]


def slnet_head(graph_embed, w1, b1, w2, b2, *, tb_max=8192):
    """graph_embed: [B, D]; w1: [D, H]; b1: [1, H]; w2: [H, 1]; b2: [1, 1].

    Returns raw_pred: [B, 1] float32.
    """
    B, D = graph_embed.shape
    H = w1.shape[1]
    assert w1.shape == (D, H)

    b1 = jnp.asarray(b1, jnp.float32).reshape(1, H)
    w2_row = jnp.asarray(w2, jnp.float32).reshape(1, H)   # [H,1] -> [1,H] (same order)
    b2_vec = jnp.asarray(b2, jnp.float32).reshape(1)      # SMEM scalar

    in_itemsize = jnp.dtype(graph_embed.dtype).itemsize
    sub = 16 if in_itemsize <= 2 else 8                   # sublane granularity

    # Per-generation VMEM budget (v7x ~64 MiB physical, v5e/v6e 128 MiB).
    try:
        vmem_cap = int(pltpu.get_tpu_info().vmem_capacity_bytes)
    except Exception:
        vmem_cap = 64 * 1024 * 1024                       # conservative fallback
    vmem_budget = int(0.7 * vmem_cap)

    # Batch tile: as big as possible (fewer ~0.35us grid-step overheads, closer
    # to the HBM roofline), but keep >= 2 grid iterations so both v7x
    # TensorCores get batch tiles under dimension_semantics=("parallel",).
    TB = _round_up(min(tb_max, max(B, 1)), sub)
    TB = min(TB, _round_up(pl.cdiv(B, 2), sub))
    TB = max(TB, sub)

    Dp = _round_up(D, 128)
    Hp = _round_up(H, 128)
    # Resident weights: W1 in bf16, b1/w2 rows in f32 (sublane/lane padded).
    w_bytes = _round_up(D, 16) * Hp * 2 + 2 * 8 * Hp * 4

    def working_set(tb):
        return (2 * tb * Dp * in_itemsize            # double-buffered graph_embed tile
                + tb * Dp * 2                        # in-kernel bf16 copy of the tile
                + tb * Hp * 4                        # f32 linear_1 / ReLU intermediate
                + 2 * w_bytes                        # weights (x2: default double-buffering)
                + 2 * 8 * _round_up(tb, 128) * 4)    # double-buffered lane-dense output

    # TODO(synk): if W1 alone overflows VMEM (very large latent_dim*hidden) this
    # head would need a K/H-tiled grid axis; it only asserts for now.
    assert working_set(sub) <= vmem_budget, "weights do not fit VMEM; need K/H tiling"
    while TB > sub and working_set(TB) > vmem_budget:
        TB = max(sub, _round_up(TB // 2, sub))

    num_tiles = pl.cdiv(B, TB)

    out = pl.pallas_call(
        _slnet_head_kernel,
        out_shape=jax.ShapeDtypeStruct((num_tiles, 1, TB), jnp.float32),
        grid_spec=pltpu.PrefetchScalarGridSpec(
            num_scalar_prefetch=0,
            grid=(num_tiles,),
            in_specs=[
                pl.BlockSpec((TB, D), lambda i: (i, 0)),             # batch tile (pipelined)
                pl.BlockSpec((D, H), lambda i: (0, 0)),              # W1 (bf16): VMEM-resident
                pl.BlockSpec((1, H), lambda i: (0, 0)),              # b1 row: VMEM-resident
                pl.BlockSpec((1, H), lambda i: (0, 0)),              # w2 row: VMEM-resident
                pl.BlockSpec(memory_space=pltpu.MemorySpace.SMEM),   # b2 scalar in SMEM
            ],
            out_specs=pl.BlockSpec((1, 1, TB), lambda i: (i, 0, 0)),
        ),
        compiler_params=pltpu.CompilerParams(
            # batch tiles are independent -> megacore sharding on v7x, harmless elsewhere
            dimension_semantics=("parallel",),
            vmem_limit_bytes=vmem_budget,
        ),
    )(graph_embed, w1.astype(jnp.bfloat16), b1, w2_row, b2_vec)

    # Rows of the ragged last tile beyond B are garbage (rows are independent,
    # so they never contaminate valid rows); slice them off and restore [B, 1].
    return out.reshape(-1)[:B].reshape(B, 1)


def slnet_forward(graph_embed, params, return_argmax=False):
    """Mirrors SLNet.forward semantics from graph_embed onward.

    Unlike torch's `.item()`, the argmax stays on-device (jit-safe, no host sync).
    """
    raw_pred = slnet_head(graph_embed, params["w1"], params["b1"],
                          params["w2"], params["b2"])
    val_argmax = jnp.argmax(raw_pred) if return_argmax else None
    return val_argmax, raw_pred


def init_params(key, latent_dim, hidden):
    """Deterministic Glorot-style init matching nn.Linear shapes."""
    k1, k2, k3, k4 = jax.random.split(key, 4)
    s1 = (6.0 / (latent_dim + hidden)) ** 0.5
    s2 = (6.0 / (hidden + 1)) ** 0.5
    return {
        # stored as [in, out] (PyTorch nn.Linear stores [out, in]; forward is x @ W.T + b)
        "w1": jax.random.uniform(k1, (latent_dim, hidden), jnp.float32, -s1, s1),
        "b1": jax.random.uniform(k2, (1, hidden), jnp.float32, -s1, s1),
        "w2": jax.random.uniform(k3, (hidden, 1), jnp.float32, -s2, s2),
        "b2": jax.random.uniform(k4, (1, 1), jnp.float32, -s2, s2),
    }


if __name__ == "__main__":
    key = jax.random.PRNGKey(0)
    k_embed, k_params = jax.random.split(key)

    num_graphs = 2          # batch of graphs
    latent_dim = 32         # hyperparams['latent_dim']
    hidden = 32             # hyperparams['hidden']

    # graph_embed plays the role of the s2v graph-level embedding output.
    graph_embed = jax.random.normal(k_embed, (num_graphs, latent_dim), jnp.float32)
    params = init_params(k_params, latent_dim, hidden)

    val_argmax, raw_pred = slnet_forward(graph_embed, params, return_argmax=True)
    raw_pred = jax.block_until_ready(raw_pred)
    assert raw_pred.shape == (num_graphs, 1)

    # Reference #1: same bf16-input / f32-accumulate math as the kernel (tight check).
    h_bf = jnp.maximum(
        jnp.dot(graph_embed.astype(jnp.bfloat16), params["w1"].astype(jnp.bfloat16),
                preferred_element_type=jnp.float32) + params["b1"], 0.0)
    ref_bf = h_bf @ params["w2"] + params["b2"]
    assert jnp.allclose(raw_pred, ref_bf, atol=1e-3, rtol=1e-3)

    # Reference #2: full f32 math (loose check — only difference is the bf16 cast).
    h_f32 = jnp.maximum(graph_embed @ params["w1"] + params["b1"], 0.0)
    ref_f32 = h_f32 @ params["w2"] + params["b2"]
    assert jnp.allclose(raw_pred, ref_f32, atol=3e-2, rtol=3e-2)

    assert int(val_argmax) == int(jnp.argmax(ref_bf))

    print("KERNEL_OK")
</pallas_src>

<mosaic_0001>
module attributes {stable_mosaic.version = 11 : i64} {
  func.func @_slnet_head_kernel(%arg0: i32, %arg1: memref<8x32xf32, #tpu.memory_space<vmem>>, %arg2: memref<32x32xbf16, #tpu.memory_space<vmem>>, %arg3: memref<1x32xf32, #tpu.memory_space<vmem>>, %arg4: memref<1x32xf32, #tpu.memory_space<vmem>>, %arg5: memref<1xf32, #tpu.memory_space<smem>>, %arg6: memref<1x1x8xf32, #tpu.memory_space<vmem>>) attributes {dimension_semantics = [#tpu.dimension_semantics<parallel>], iteration_bounds = array<i64: 1>, scalar_prefetch = 0 : i64, scratch_operands = 0 : i64, tpu.core_type = #tpu.core_type<tc>, window_params = [{transform_indices = @transform_0, window_bounds = array<i64: 8, 32>}, {pipeline_mode = #tpu.pipeline_mode<synchronous>, transform_indices = @transform_1, window_bounds = array<i64: 32, 32>}, {pipeline_mode = #tpu.pipeline_mode<synchronous>, transform_indices = @transform_2, window_bounds = array<i64: 1, 32>}, {pipeline_mode = #tpu.pipeline_mode<synchronous>, transform_indices = @transform_3, window_bounds = array<i64: 1, 32>}, {transform_indices = @transform_4, window_bounds = array<i64: 1>}, {transform_indices = @transform_5, window_bounds = array<i64: 1, 1, 8>}]} {
    %c0 = arith.constant 0 : index
    %c0_0 = arith.constant 0 : index
    %0 = vector.load %arg1[%c0, %c0_0] : memref<8x32xf32, #tpu.memory_space<vmem>>, vector<8x32xf32>
    %1 = arith.truncf %0 : vector<8x32xf32> to vector<8x32xbf16>
    %c0_1 = arith.constant 0 : index
    %c0_2 = arith.constant 0 : index
    %2 = vector.load %arg2[%c0_1, %c0_2] : memref<32x32xbf16, #tpu.memory_space<vmem>>, vector<32x32xbf16>
    %cst = arith.constant dense<0.000000e+00> : vector<8x32xf32>
    %3 = tpu.matmul %1, %2, %cst {dimension_numbers = #tpu.dot_dimension_numbers<[1], [0], [0], [1], [0, 0, 1, 1], [], []>} : vector<8x32xbf16>, vector<32x32xbf16>, vector<8x32xf32> -> vector<8x32xf32>
    %c0_3 = arith.constant 0 : index
    %c0_4 = arith.constant 0 : index
    %4 = vector.load %arg3[%c0_3, %c0_4] : memref<1x32xf32, #tpu.memory_space<vmem>>, vector<1x32xf32>
    %5 = vector.broadcast %4 : vector<1x32xf32> to vector<8x32xf32>
    %6 = arith.addf %3, %5 : vector<8x32xf32>
    %cst_5 = arith.constant 0.000000e+00 : f32
    %7 = vector.broadcast %cst_5 : f32 to vector<8x32xf32>
    %8 = arith.maximumf %6, %7 : vector<8x32xf32>
    %c0_6 = arith.constant 0 : index
    %c0_7 = arith.constant 0 : index
    %9 = vector.load %arg4[%c0_6, %c0_7] : memref<1x32xf32, #tpu.memory_space<vmem>>, vector<1x32xf32>
    %10 = vector.broadcast %9 : vector<1x32xf32> to vector<8x32xf32>
    %11 = arith.mulf %8, %10 : vector<8x32xf32>
    %cst_8 = arith.constant dense<0.000000e+00> : vector<8xf32>
    %12 = vector.multi_reduction <add>, %11, %cst_8 [1] : vector<8x32xf32> to vector<8xf32>
    %c0_9 = arith.constant 0 : index
    %13 = memref.load %arg5[%c0_9] : memref<1xf32, #tpu.memory_space<smem>>
    %14 = vector.broadcast %13 : f32 to vector<8xf32>
    %15 = arith.addf %12, %14 : vector<8xf32>
    %16 = vector.shape_cast %15 : vector<8xf32> to vector<1x1x8xf32>
    %c0_10 = arith.constant 0 : index
    %c0_11 = arith.constant 0 : index
    %c0_12 = arith.constant 0 : index
    %17 = vector.load %arg6[%c0_10, %c0_11, %c0_12] : memref<1x1x8xf32, #tpu.memory_space<vmem>>, vector<1x1x8xf32>
    tpu.vector_store %arg6[%c0_10, %c0_11, %c0_12], %16 {strides = array<i32>} : memref<1x1x8xf32, #tpu.memory_space<vmem>>, vector<1x1x8xf32>,
    return
  }
  func.func @transform_0(%arg0: i32) -> (i32, i32) {
    %c0_i32 = arith.constant 0 : i32
    %c0_i32_0 = arith.constant 0 : i32
    return %arg0, %c0_i32 : i32, i32
  }
  func.func @transform_1(%arg0: i32) -> (i32, i32) {
    %c0_i32 = arith.constant 0 : i32
    %c0_i32_0 = arith.constant 0 : i32
    %c0_i32_1 = arith.constant 0 : i32
    return %c0_i32, %c0_i32_0 : i32, i32
  }
  func.func @transform_2(%arg0: i32) -> (i32, i32) {
    %c0_i32 = arith.constant 0 : i32
    %c0_i32_0 = arith.constant 0 : i32
    %c0_i32_1 = arith.constant 0 : i32
    return %c0_i32, %c0_i32_0 : i32, i32
  }
  func.func @transform_3(%arg0: i32) -> (i32, i32) {
    %c0_i32 = arith.constant 0 : i32
    %c0_i32_0 = arith.constant 0 : i32
    %c0_i32_1 = arith.constant 0 : i32
    return %c0_i32, %c0_i32_0 : i32, i32
  }
  func.func @transform_4(%arg0: i32) -> i32 {
    %c0_i32 = arith.constant 0 : i32
    %c0_i32_0 = arith.constant 0 : i32
    return %c0_i32 : i32
  }
  func.func @transform_5(%arg0: i32) -> (i32, i32, i32) {
    %c0_i32 = arith.constant 0 : i32
    %c0_i32_0 = arith.constant 0 : i32
    %c0_i32_1 = arith.constant 0 : i32
    return %arg0, %c0_i32, %c0_i32_0 : i32, i32, i32
  }
}

</mosaic_0001>

<llo_original>
// kernel: tpu_custom_call.1
$region0: #{tpu_custom_call.1}
  #allocation0 [shape = 'u32[]', space=smem, size = 0x4, offset = 0x4, fixed_abs, tag = 'smem constant byte address 0x4 - core index']
  #allocation1 [shape = 'u32[144,128]{1,0:T(1,128)}', space=vmem, size = 0x12000, scoped, tag = 'internal scratch']
  #allocation2 [shape = 'f32[1]{0:T(128)S(6)}', space=smem, size = 0x200, scoped, tag = 'scoped memory for tpu_custom_call.1']
  %s0 = inlined_call_operand.vmem [shape: f32[2,32], index: 0, kind: input, shape index: {}]
  %s1 = inlined_call_operand.hbm [shape: bf16[32,32], index: 1, kind: input, shape index: {}]
  %s2 = inlined_call_operand.vmem [shape: f32[1,32], index: 2, kind: input, shape index: {}]
  %s3 = inlined_call_operand.vmem [shape: f32[1,32], index: 3, kind: input, shape index: {}]
  %s4 = inlined_call_operand.<no memory space> [shape: f32[1], index: 4, kind: input, shape index: {}]
  %s5 = inlined_call_operand.hbm [shape: f32[1,1,8], index: 5, kind: output, shape index: {}]
  %s6 = sld [smem:[#allocation0]]
  $region34: #{tpu_custom_call.1} parent=0
    _
  %s8 = ssub.s32 1, %s6
  %s9 = scalar_select 0, %s8, %s6
  %10 = sst [smem:[#allocation2]] %s4
  $region1: #{tpu_custom_call.1} parent=0
    #allocation3 [shape = 'u8[8192]{0}', space=vmem, size = 0x2000, scoped, tag = 'input window, operand 1, single buffered']
    #allocation4 [shape = 's32[1]{0}', space=sflag, size = 0x4, scoped, tag = 'scoped memory for tpu_custom_call.1']
    #allocation5 [shape = 's32[1]{0}', space=sflag, size = 0x4, scoped, tag = 'scoped memory for tpu_custom_call.1']
    #allocation6 [shape = 'u8[512]{0}', space=vmem, size = 0x400, scoped, tag = 'output window, operand 0, single buffered']
    %11 = vsyncpa [#allocation4], 0
    %12 = vsyncpa [#allocation5], 0
    // Predicated region
    $region2: #{tpu_custom_call.1} parent=1 // pred_check
      _
    $region3: #{tpu_custom_call.1} parent=1 // pred_check_branch
      %14 = sbr.rel (0) target = $region5
    $region4: #{tpu_custom_call.1} parent=1 // pred_region
      _
    $region5: #{tpu_custom_call.1} parent=1 // pred_fallthru
      _
    // Predicated region
    $region6: #{tpu_custom_call.1} parent=1 // pred_check
      _
    $region7: #{tpu_custom_call.1} parent=1 // pred_check_branch
      %16 = sbr.rel (0) target = $region9
    $region8: #{tpu_custom_call.1} parent=1 // pred_region
      %s18 = ssub.s32 256, 256
      %19 = vsyncadd [#allocation4], %s18
      %s20 = sshll.u32 [#allocation3], 4
      %s21 = int_to_ptr.vmem [resolvable:$true] %s20
      %26 = dma.hbm_to_vmem [thread:$0]  %s1, 256, %s21, [#allocation4], 64, 64, 4
    $region9: #{tpu_custom_call.1} parent=1 // pred_fallthru
      _
    // Predicated region
    $region10: #{tpu_custom_call.1} parent=1 // pred_check
      _
    $region11: #{tpu_custom_call.1} parent=1 // pred_check_branch
      %28 = sbr.rel (0) target = $region13
    $region12: #{tpu_custom_call.1} parent=1 // pred_region
      _
    $region13: #{tpu_custom_call.1} parent=1 // pred_fallthru
      _
    // Predicated region
    $region14: #{tpu_custom_call.1} parent=1 // pred_check
      _
    $region15: #{tpu_custom_call.1} parent=1 // pred_check_branch
      %30 = sbr.rel (0) target = $region17
    $region16: #{tpu_custom_call.1} parent=1 // pred_region
      _
    $region17: #{tpu_custom_call.1} parent=1 // pred_fallthru
      _
    // Predicated region
    $region18: #{tpu_custom_call.1} parent=1 // pred_check
      _
    $region19: #{tpu_custom_call.1} parent=1 // pred_check_branch
      %32 = sbr.rel (0) target = $region21
    $region20: #{tpu_custom_call.1} parent=1 // pred_region
      _
    $region21: #{tpu_custom_call.1} parent=1 // pred_fallthru
      _
    // Predicated region
    $region22: #{tpu_custom_call.1} parent=1 // pred_check
      _
    $region23: #{tpu_custom_call.1} parent=1 // pred_check_branch
      %34 = sbr.rel (0) target = $region25
    $region24: #{tpu_custom_call.1} parent=1 // pred_region
      %35 = dma.done [#allocation4], 256
    $region25: #{tpu_custom_call.1} parent=1 // pred_fallthru
      _
    %v37 = vld [vmem:[%s0] sm:$0xff]
    %v38 = vpack.c.bf16 %v37, %v37
    %v39 = vld [vmem:[#allocation3] sm:$0xf]
    %v40 = vld [vmem:[#allocation3 + $0x4] sm:$0xf]
    %v41 = vld [vmem:[#allocation3 + $0x8] sm:$0xf]
    %v42 = vld [vmem:[#allocation3 + $0xc] sm:$0xf]
    %v43 = vld [vmem:[%s2] sm:$0x1]
    %v45 = vlaneseq
    %v46 = vshrl.u32 %v45, 7
    %v47 = vsub.s32 0, %v46
    %v48 = vrot.slane %v43, %v47
    %v54 = vunpack.c.l.b16 %v39
    %v55 = vunpack.c.l.b16 %v40
    %v56 = vunpack.c.l.b16 %v41
    %v57 = vunpack.c.l.b16 %v42
    %v58 = vpack.c.b16 %v55, %v54
    %v59 = vpack.c.b16 %v57, %v56
    %vm62 = vcmask 261120
    %v64 = vsel %vm62, %v38, 0
    %66 = vmatprep.subr.bf16.mxu0 0
    %67 = vmatpush1.bf16.msra.mxu0 0
    %68 = vmatprep.subr.bf16.mxu0 0
    %69 = vmatpush1.bf16.msra.mxu0 0
    %70 = vmatprep.subr.bf16.mxu0 0
    %71 = vmatpush1.bf16.msra.mxu0 0
    %72 = vmatprep.subr.bf16.mxu0 0
    %73 = vmatpush1.bf16.msra.mxu0 0
    %74 = vmatprep.subr.bf16.mxu0 0
    %75 = vmatpush1.bf16.msra.mxu0 0
    %76 = vmatprep.subr.bf16.mxu0 0
    %77 = vmatpush1.bf16.msra.mxu0 0
    %78 = vmatprep.subr.bf16.mxu0 0
    %79 = vmatpush1.bf16.msra.mxu0 %v59
    %80 = vmatprep.subr.bf16.mxu0 0
    %81 = vmatpush1.bf16.msra.mxu0 %v58
    %82 = vmatprep.subr.bf16.mxu0 0
    %83 = vmatpush2.bf16.msra.mxu0 0
    %84 = vmatprep.subr.bf16.mxu0 0
    %85 = vmatpush2.bf16.msra.mxu0 0
    %86 = vmatprep.subr.bf16.mxu0 0
    %87 = vmatpush2.bf16.msra.mxu0 0
    %88 = vmatprep.subr.bf16.mxu0 0
    %89 = vmatpush2.bf16.msra.mxu0 0
    %90 = vmatprep.subr.bf16.mxu0 0
    %91 = vmatpush2.bf16.msra.mxu0 0
    %92 = vmatprep.subr.bf16.mxu0 0
    %93 = vmatpush2.bf16.msra.mxu0 0
    %94 = vmatprep.subr.bf16.mxu0 0
    %95 = vmatpush2.bf16.msra.mxu0 0
    %96 = vmatprep.subr.bf16.mxu0 0
    %97 = vmatpush2.bf16.msra.mxu0 0
    %98 = vmatprep.mubr.bf16.mxu0 0
    %99 = vmatmul.mubr.bf16.gmra.mxu0 %v64
    %v100 = vpop.f32.mrf.mxu0
    %v101 = vadd.f32 %v48, %v100
    %v102 = vpop.f32.mrf.mxu0
    %v103 = vpop.f32.mrf.mxu0
    %v104 = vpop.f32.mrf.mxu0
    %105 = vdwg.mxu0
    %v106 = vmax.f32 %v101, 0.0
    %v107 = vld [vmem:[%s3] sm:$0x1]
    %v109 = vlaneseq
    %v110 = vshrl.u32 %v109, 7
    %v111 = vsub.s32 0, %v110
    %v112 = vrot.slane %v107, %v111
    %v114 = vmul.f32 %v106, %v112
    %v115 = vsel %vm62, %v114, 0.0
    %116 = vadd.xlane.f32.xlu0 %v115
    %v117 = vpop.xlane.xlu0 %116
    %s118 = sld [smem:[#allocation2]]
    %v119 = vstv %s118
    %v120 = vadd.f32 %v117, %v119
    %v122 = vlaneseq
    %v123 = vand.u32 %v122, 127
    %v124 = vlaneseq
    %v125 = vshrl.u32 %v124, 7
    %v126 = vsub.s32 %v123, %v125
    %v127 = vrot.slane %v120, %v126
    %vm129 = vcmask 57344
    %130 = vst.msk [vmem:[#allocation6] sm:$0x1] %vm129, %v127
    // Predicated region
    $region26: #{tpu_custom_call.1} parent=1 // pred_check
      _
    $region27: #{tpu_custom_call.1} parent=1 // pred_check_branch
      %132 = sbr.rel (0) target = $region29
    $region28: #{tpu_custom_call.1} parent=1 // pred_region
      %s134 = ssub.s32 16, 16
      %135 = vsyncadd [#allocation5], %s134
      %s137 = sshll.u32 [#allocation6], 4
      %s138 = int_to_ptr.vmem [resolvable:$true] %s137
      %140 = dma.vmem_to_hbm [thread:$0]  %s138, 16, %s5, [#allocation5]
    $region29: #{tpu_custom_call.1} parent=1 // pred_fallthru
      _
    // Predicated region
    $region30: #{tpu_custom_call.1} parent=1 // pred_check
      _
    $region31: #{tpu_custom_call.1} parent=1 // pred_check_branch
      %142 = sbr.rel (0) target = $region33
    $region32: #{tpu_custom_call.1} parent=1 // pred_region
      %143 = dma.done [#allocation5], 16
    $region33: #{tpu_custom_call.1} parent=1 // pred_fallthru
      _
    %144 = vsyncpa [#allocation4], 1
    %145 = vsyncpa [#allocation5], 1

</llo_original>
